<compile_context>
chip_gen: v5e
topology: v5e:2x2
jax: 0.10.0
libtpu: 0.0.40
codegen_flags: <defaults>
</compile_context>

<pallas_src>
import functools

import jax
import jax.numpy as jnp
from jax.experimental import pallas as pl
from jax.experimental.pallas import tpu as pltpu


def _round_up(x, m):
    return (x + m - 1) // m * m


def _vmem_capacity_bytes():
    """Physical VMEM of this chip's TensorCore; conservative fallback."""
    try:
        cap = getattr(pltpu.get_tpu_info(), "vmem_capacity_bytes", None)
        if cap:
            return int(cap)
    except Exception:
        pass
    return 64 * 1024 * 1024  # smallest of v5e/v6e/v7x (v7x per-core VMEM)


# ---------------------------------------------------------------------------
# Kernels
# ---------------------------------------------------------------------------
def _ln_kernel_packed(x_ref, w_ref, blk_ref, o_ref, *, inv_c):
    """Lane-packed path (C < 128 and 128 % C == 0).

    Each 128-lane row of the tile holds g = 128 // C logical rows side by side.
    Per-logical-row sums are segmented sums over C-lane segments, computed on
    the MXU with a (128, 128) block-diagonal ones matrix; results land already
    broadcast across each segment, so rsqrt/scale stay fully lane-dense and the
    XLU does no reduction work.
    """
    x = x_ref[...].astype(jnp.float32)
    blk = blk_ref[...]                                            # (W, W) f32 block-diag ones
    s1 = jnp.dot(x, blk, preferred_element_type=jnp.float32)      # sum(x)   per segment
    s2 = jnp.dot(x * x, blk, preferred_element_type=jnp.float32)  # sum(x^2) per segment
    mean = s1 * inv_c
    var = jnp.maximum(s2 * inv_c - mean * mean, 0.0)              # single-pass population var
    inv = jax.lax.rsqrt(var + 1e-5)
    o_ref[...] = (x * inv * w_ref[...]).astype(o_ref.dtype)


def _ln_kernel_wide(x_ref, w_ref, o_ref, *, inv_c):
    """General path (C >= 128 or C does not divide 128): per-row reduction with a
    single sweep over the tile (E[x^2] - mean^2)."""
    x = x_ref[...].astype(jnp.float32)
    s1 = jnp.sum(x, axis=-1, keepdims=True)
    s2 = jnp.sum(x * x, axis=-1, keepdims=True)
    mean = s1 * inv_c
    var = jnp.maximum(s2 * inv_c - mean * mean, 0.0)
    inv = jax.lax.rsqrt(var + 1e-5)
    o_ref[...] = (x * inv * w_ref[...]).astype(o_ref.dtype)


# ---------------------------------------------------------------------------
# Wrapper
# ---------------------------------------------------------------------------
def bias_free_layernorm(x, weight, *, row_tile=None):
    """x: (..., C), weight: (C,). Returns the same shape/dtype as x.

    row_tile (in packed rows) is normally auto-sized from the chip's VMEM; the
    override exists mainly to exercise the multi-tile / padded path in tests.
    """
    orig_shape = x.shape
    C = int(orig_shape[-1])
    rows = 1
    for d in orig_shape[:-1]:
        rows *= int(d)

    x2 = x.reshape(rows, C)

    # Lane packing: g logical rows per 128-lane row when C divides 128.
    packed = (C < 128) and (128 % C == 0)
    g = (128 // C) if packed else 1
    W = g * C

    itemsize = jnp.dtype(x.dtype).itemsize
    sub = 8 if itemsize >= 4 else 16        # sublane granularity (16 for bf16 packing)

    # Tile sizing: a few MiB of x per tile (needed to approach HBM roofline),
    # scaled to this generation's VMEM so double-buffered in/out plus f32
    # temporaries fit comfortably on v7x (64 MiB) as well as v5e/v6e (128 MiB).
    vmem_cap = _vmem_capacity_bytes()
    tile_budget = min(vmem_cap // 24, 4 * 1024 * 1024)   # bytes (f32) of x per tile
    row_budget = max(sub, (tile_budget // (W * 4)) // sub * sub)
    if row_tile is not None:                              # test override
        row_budget = max(sub, (int(row_tile) // sub) * sub)

    R = -(-rows // g)                                     # packed rows before padding
    if R <= row_budget:
        tile_rows = _round_up(R, sub)
        grid_rows = 1
    else:
        tile_rows = row_budget
        grid_rows = -(-R // tile_rows)
    R_pad = grid_rows * tile_rows
    rows_pad = R_pad * g

    if rows_pad != rows:                                  # zero rows -> zero output, sliced off
        x2 = jnp.pad(x2, ((0, rows_pad - rows), (0, 0)))
    xp = x2.reshape(R_pad, W)

    w_full = jnp.tile(weight.reshape(1, C).astype(jnp.float32), (1, g))   # (1, W)

    # Raise the scoped VMEM limit so the larger tiles actually fit
    # (double-buffered in/out, f32 temporaries, resident weight/block matrix).
    tile_io_bytes = tile_rows * W * itemsize
    need = 4 * tile_io_bytes + 6 * tile_rows * W * 4 + W * W * 4 + (4 << 20)
    vmem_limit = int(min(vmem_cap * 3 // 4, max(need, 32 << 20)))

    x_spec = pl.BlockSpec((tile_rows, W), lambda i: (i, 0))
    w_spec = pl.BlockSpec((1, W), lambda i: (0, 0))
    o_spec = pl.BlockSpec((tile_rows, W), lambda i: (i, 0))
    common = dict(
        out_shape=jax.ShapeDtypeStruct((R_pad, W), x.dtype),
        compiler_params=pltpu.CompilerParams(
            dimension_semantics=("parallel",),   # shards rows over both TCs on v7x
            vmem_limit_bytes=vmem_limit,
        ),
    )

    if packed:
        # blk[k, j] = 1 iff lanes k and j lie in the same C-lane segment.
        blk = jnp.kron(jnp.eye(g, dtype=jnp.float32),
                       jnp.ones((C, C), dtype=jnp.float32))            # (W, W)
        out = pl.pallas_call(
            functools.partial(_ln_kernel_packed, inv_c=1.0 / C),
            grid_spec=pltpu.PrefetchScalarGridSpec(
                num_scalar_prefetch=0,
                grid=(grid_rows,),
                in_specs=[x_spec, w_spec, pl.BlockSpec((W, W), lambda i: (0, 0))],
                out_specs=o_spec,
            ),
            **common,
        )(xp, w_full, blk)
    else:
        out = pl.pallas_call(
            functools.partial(_ln_kernel_wide, inv_c=1.0 / C),
            grid_spec=pltpu.PrefetchScalarGridSpec(
                num_scalar_prefetch=0,
                grid=(grid_rows,),
                in_specs=[x_spec, w_spec],
                out_specs=o_spec,
            ),
            **common,
        )(xp, w_full)

    out = out.reshape(rows_pad, C)
    if rows_pad != rows:
        out = out[:rows]
    return out.reshape(orig_shape)


def _reference(x, weight):
    x32 = x.astype(jnp.float32)
    var = jnp.var(x32, axis=-1, keepdims=True)            # population variance (ddof=0)
    return (x32 / jnp.sqrt(var + 1e-5) * weight.astype(jnp.float32)).astype(x.dtype)


if __name__ == "__main__":
    key = jax.random.PRNGKey(0)

    # Module-sized example: (batch, seq, hidden) with hidden = normalized_shape.
    batch, seq, hidden = 2, 8, 32
    weight = jnp.ones((hidden,), dtype=jnp.float32)       # nn.Parameter(torch.ones(C))
    x = jax.random.normal(key, (batch, seq, hidden), dtype=jnp.float32)

    out = jax.block_until_ready(bias_free_layernorm(x, weight))
    assert out.shape == x.shape and out.dtype == x.dtype
    assert jnp.allclose(out, _reference(x, weight), atol=2e-5, rtol=2e-5)

    # Extra coverage (still small): multi-tile grid + row padding on the packed path.
    k1, k2 = jax.random.split(key)
    x_big = jax.random.normal(k1, (2, 257, 32), dtype=jnp.float32)
    out_big = jax.block_until_ready(bias_free_layernorm(x_big, weight, row_tile=8))
    assert jnp.allclose(out_big, _reference(x_big, weight), atol=2e-5, rtol=2e-5)

    # Extra coverage: general (non-packed) path, C that does not divide 128.
    w48 = jnp.ones((48,), dtype=jnp.float32)
    x48 = jax.random.normal(k2, (3, 7, 48), dtype=jnp.float32)
    out48 = jax.block_until_ready(bias_free_layernorm(x48, w48))
    assert jnp.allclose(out48, _reference(x48, w48), atol=2e-5, rtol=2e-5)

    print("KERNEL_OK")
</pallas_src>

<mosaic_0001>
module attributes {stable_mosaic.version = 11 : i64} {
  func.func @_ln_kernel_packed(%arg0: i32, %arg1: memref<8x128xf32, #tpu.memory_space<vmem>>, %arg2: memref<1x128xf32, #tpu.memory_space<vmem>>, %arg3: memref<128x128xf32, #tpu.memory_space<vmem>>, %arg4: memref<8x128xf32, #tpu.memory_space<vmem>>) attributes {dimension_semantics = [#tpu.dimension_semantics<parallel>], iteration_bounds = array<i64: 1>, scalar_prefetch = 0 : i64, scratch_operands = 0 : i64, tpu.core_type = #tpu.core_type<tc>, window_params = [{transform_indices = @transform_0, window_bounds = array<i64: 8, 128>}, {pipeline_mode = #tpu.pipeline_mode<synchronous>, transform_indices = @transform_1, window_bounds = array<i64: 1, 128>}, {pipeline_mode = #tpu.pipeline_mode<synchronous>, transform_indices = @transform_2, window_bounds = array<i64: 128, 128>}, {transform_indices = @transform_3, window_bounds = array<i64: 8, 128>}]} {
    %c0 = arith.constant 0 : index
    %c0_0 = arith.constant 0 : index
    %0 = vector.load %arg1[%c0, %c0_0] : memref<8x128xf32, #tpu.memory_space<vmem>>, vector<8x128xf32>
    %c0_1 = arith.constant 0 : index
    %c0_2 = arith.constant 0 : index
    %1 = vector.load %arg3[%c0_1, %c0_2] : memref<128x128xf32, #tpu.memory_space<vmem>>, vector<128x128xf32>
    %cst = arith.constant dense<0.000000e+00> : vector<8x128xf32>
    %2 = tpu.matmul %0, %1, %cst {dimension_numbers = #tpu.dot_dimension_numbers<[1], [0], [0], [1], [0, 0, 1, 1], [], []>} : vector<8x128xf32>, vector<128x128xf32>, vector<8x128xf32> -> vector<8x128xf32>
    %3 = arith.mulf %0, %0 : vector<8x128xf32>
    %cst_3 = arith.constant dense<0.000000e+00> : vector<8x128xf32>
    %4 = tpu.matmul %3, %1, %cst_3 {dimension_numbers = #tpu.dot_dimension_numbers<[1], [0], [0], [1], [0, 0, 1, 1], [], []>} : vector<8x128xf32>, vector<128x128xf32>, vector<8x128xf32> -> vector<8x128xf32>
    %cst_4 = arith.constant 3.125000e-02 : f32
    %5 = vector.broadcast %cst_4 : f32 to vector<8x128xf32>
    %6 = arith.mulf %2, %5 : vector<8x128xf32>
    %cst_5 = arith.constant 3.125000e-02 : f32
    %7 = vector.broadcast %cst_5 : f32 to vector<8x128xf32>
    %8 = arith.mulf %4, %7 : vector<8x128xf32>
    %9 = arith.mulf %6, %6 : vector<8x128xf32>
    %10 = arith.subf %8, %9 : vector<8x128xf32>
    %cst_6 = arith.constant 0.000000e+00 : f32
    %11 = vector.broadcast %cst_6 : f32 to vector<8x128xf32>
    %12 = arith.maximumf %10, %11 : vector<8x128xf32>
    %cst_7 = arith.constant 9.99999974E-6 : f32
    %13 = vector.broadcast %cst_7 : f32 to vector<8x128xf32>
    %14 = arith.addf %12, %13 : vector<8x128xf32>
    %15 = math.rsqrt %14 : vector<8x128xf32>
    %16 = arith.mulf %0, %15 : vector<8x128xf32>
    %c0_8 = arith.constant 0 : index
    %c0_9 = arith.constant 0 : index
    %17 = vector.load %arg2[%c0_8, %c0_9] : memref<1x128xf32, #tpu.memory_space<vmem>>, vector<1x128xf32>
    %18 = vector.broadcast %17 : vector<1x128xf32> to vector<8x128xf32>
    %19 = arith.mulf %16, %18 : vector<8x128xf32>
    %c0_10 = arith.constant 0 : index
    %c0_11 = arith.constant 0 : index
    %20 = vector.load %arg4[%c0_10, %c0_11] : memref<8x128xf32, #tpu.memory_space<vmem>>, vector<8x128xf32>
    tpu.vector_store %arg4[%c0_10, %c0_11], %19 {strides = array<i32>} : memref<8x128xf32, #tpu.memory_space<vmem>>, vector<8x128xf32>,
    return
  }
  func.func @transform_0(%arg0: i32) -> (i32, i32) {
    %c0_i32 = arith.constant 0 : i32
    %c0_i32_0 = arith.constant 0 : i32
    return %arg0, %c0_i32 : i32, i32
  }
  func.func @transform_1(%arg0: i32) -> (i32, i32) {
    %c0_i32 = arith.constant 0 : i32
    %c0_i32_0 = arith.constant 0 : i32
    %c0_i32_1 = arith.constant 0 : i32
    return %c0_i32, %c0_i32_0 : i32, i32
  }
  func.func @transform_2(%arg0: i32) -> (i32, i32) {
    %c0_i32 = arith.constant 0 : i32
    %c0_i32_0 = arith.constant 0 : i32
    %c0_i32_1 = arith.constant 0 : i32
    return %c0_i32, %c0_i32_0 : i32, i32
  }
  func.func @transform_3(%arg0: i32) -> (i32, i32) {
    %c0_i32 = arith.constant 0 : i32
    %c0_i32_0 = arith.constant 0 : i32
    return %arg0, %c0_i32 : i32, i32
  }
}

</mosaic_0001>

<llo_original>
// kernel: tpu_custom_call.1
$region0: #{tpu_custom_call.1}
  #allocation0 [shape = 'u32[]', space=smem, size = 0x4, offset = 0x4, fixed_abs, tag = 'smem constant byte address 0x4 - core index']
  #allocation1 [shape = 'u32[72,128]{1,0:T(1,128)}', space=vmem, size = 0x9000, scoped, tag = 'internal scratch']
  %s0 = inlined_call_operand.hbm [shape: f32[8,128], index: 0, kind: input, shape index: {}]
  %s1 = inlined_call_operand.hbm [shape: f32[1,128], index: 1, kind: input, shape index: {}]
  %s2 = inlined_call_operand.hbm [shape: f32[128,128], index: 2, kind: input, shape index: {}]
  %s3 = inlined_call_operand.hbm [shape: f32[8,128], index: 3, kind: output, shape index: {}]
  %s4 = sld [smem:[#allocation0]]
  $region34: #{tpu_custom_call.1} parent=0
    _
  %s6 = ssub.s32 1, %s4
  %s7 = scalar_select 0, %s6, %s4
  $region1: #{tpu_custom_call.1} parent=0
    #allocation2 [shape = 'u8[4096]{0}', space=vmem, size = 0x1000, scoped, tag = 'input window, operand 0, single buffered']
    #allocation3 [shape = 's32[1]{0}', space=sflag, size = 0x4, scoped, tag = 'scoped memory for tpu_custom_call.1']
    #allocation4 [shape = 's32[1]{0}', space=sflag, size = 0x4, scoped, tag = 'scoped memory for tpu_custom_call.1']
    #allocation5 [shape = 'u8[512]{0}', space=vmem, size = 0x400, scoped, tag = 'input window, operand 1, single buffered']
    #allocation6 [shape = 's32[1]{0}', space=sflag, size = 0x4, scoped, tag = 'scoped memory for tpu_custom_call.1']
    #allocation7 [shape = 'u8[65536]{0}', space=vmem, size = 0x10000, scoped, tag = 'input window, operand 2, single buffered']
    #allocation8 [shape = 'u8[4096]{0}', space=vmem, size = 0x1000, scoped, tag = 'output window, operand 0, single buffered']
    %8 = vsyncpa [#allocation3], 0
    %9 = vsyncpa [#allocation6], 0
    %10 = vsyncpa [#allocation4], 0
    // Predicated region
    $region2: #{tpu_custom_call.1} parent=1 // pred_check
      _
    $region3: #{tpu_custom_call.1} parent=1 // pred_check_branch
      %12 = sbr.rel (0) target = $region5
    $region4: #{tpu_custom_call.1} parent=1 // pred_region
      %14 = vsyncadd [#allocation3], 0
      %s16 = sshll.u32 %s0, 4
      %s17 = int_to_ptr.hbm [resolvable:$true] %s16
      %s18 = sshll.u32 [#allocation2], 4
      %s19 = int_to_ptr.vmem [resolvable:$true] %s18
      %21 = dma.hbm_to_vmem [thread:$0]  %s17, 128, %s19, [#allocation3]
    $region5: #{tpu_custom_call.1} parent=1 // pred_fallthru
      _
    // Predicated region
    $region6: #{tpu_custom_call.1} parent=1 // pred_check
      _
    $region7: #{tpu_custom_call.1} parent=1 // pred_check_branch
      %23 = sbr.rel (0) target = $region9
    $region8: #{tpu_custom_call.1} parent=1 // pred_region
      %25 = vsyncadd [#allocation6], 0
      %s27 = sshll.u32 %s1, 4
      %s28 = int_to_ptr.hbm [resolvable:$true] %s27
      %s29 = sshll.u32 [#allocation5], 4
      %s30 = int_to_ptr.vmem [resolvable:$true] %s29
      %32 = dma.hbm_to_vmem [thread:$0]  %s28, 16, %s30, [#allocation6]
    $region9: #{tpu_custom_call.1} parent=1 // pred_fallthru
      _
    // Predicated region
    $region10: #{tpu_custom_call.1} parent=1 // pred_check
      _
    $region11: #{tpu_custom_call.1} parent=1 // pred_check_branch
      %34 = sbr.rel (0) target = $region13
    $region12: #{tpu_custom_call.1} parent=1 // pred_region
      %36 = vsyncadd [#allocation6], 0
      %s37 = sshll.u32 %s2, 4
      %s38 = int_to_ptr.hbm [resolvable:$true] %s37
      %s39 = sshll.u32 [#allocation7], 4
      %s40 = int_to_ptr.vmem [resolvable:$true] %s39
      %45 = dma.hbm_to_vmem [thread:$0]  %s38, 2048, %s40, [#allocation6], 128, 128, 8
    $region13: #{tpu_custom_call.1} parent=1 // pred_fallthru
      _
    // Predicated region
    $region14: #{tpu_custom_call.1} parent=1 // pred_check
      _
    $region15: #{tpu_custom_call.1} parent=1 // pred_check_branch
      %47 = sbr.rel (0) target = $region17
    $region16: #{tpu_custom_call.1} parent=1 // pred_region
      %49 = dma.done [#allocation3], 128
    $region17: #{tpu_custom_call.1} parent=1 // pred_fallthru
      _
    // Predicated region
    $region18: #{tpu_custom_call.1} parent=1 // pred_check
      _
    $region19: #{tpu_custom_call.1} parent=1 // pred_check_branch
      %51 = sbr.rel (0) target = $region21
    $region20: #{tpu_custom_call.1} parent=1 // pred_region
      %53 = dma.done [#allocation6], 16
    $region21: #{tpu_custom_call.1} parent=1 // pred_fallthru
      _
    // Predicated region
    $region22: #{tpu_custom_call.1} parent=1 // pred_check
      _
    $region23: #{tpu_custom_call.1} parent=1 // pred_check_branch
      %55 = sbr.rel (0) target = $region25
    $region24: #{tpu_custom_call.1} parent=1 // pred_region
      %57 = dma.done [#allocation6], 2048
    $region25: #{tpu_custom_call.1} parent=1 // pred_fallthru
      _
    %v58 = vld [vmem:[#allocation2] sm:$0xff]
    %v59 = vld [vmem:[#allocation7] sm:$0xff]
    %v60 = vld [vmem:[#allocation7 + $0x8] sm:$0xff]
    %v61 = vld [vmem:[#allocation7 + $0x10] sm:$0xff]
    %v62 = vld [vmem:[#allocation7 + $0x18] sm:$0xff]
    %v63 = vld [vmem:[#allocation7 + $0x20] sm:$0xff]
    %v64 = vld [vmem:[#allocation7 + $0x28] sm:$0xff]
    %v65 = vld [vmem:[#allocation7 + $0x30] sm:$0xff]
    %v66 = vld [vmem:[#allocation7 + $0x38] sm:$0xff]
    %v67 = vld [vmem:[#allocation7 + $0x40] sm:$0xff]
    %v68 = vld [vmem:[#allocation7 + $0x48] sm:$0xff]
    %v69 = vld [vmem:[#allocation7 + $0x50] sm:$0xff]
    %v70 = vld [vmem:[#allocation7 + $0x58] sm:$0xff]
    %v71 = vld [vmem:[#allocation7 + $0x60] sm:$0xff]
    %v72 = vld [vmem:[#allocation7 + $0x68] sm:$0xff]
    %v73 = vld [vmem:[#allocation7 + $0x70] sm:$0xff]
    %v74 = vld [vmem:[#allocation7 + $0x78] sm:$0xff]
    %75 = vmatpush.msra.mxu0 %v74
    %76 = vmatpush.msra.mxu0 %v73
    %77 = vmatpush.msra.mxu0 %v72
    %78 = vmatpush.msra.mxu0 %v71
    %79 = vmatpush.msra.mxu0 %v70
    %80 = vmatpush.msra.mxu0 %v69
    %81 = vmatpush.msra.mxu0 %v68
    %82 = vmatpush.msra.mxu0 %v67
    %83 = vmatpush.msra.mxu0 %v66
    %84 = vmatpush.msra.mxu0 %v65
    %85 = vmatpush.msra.mxu0 %v64
    %86 = vmatpush.msra.mxu0 %v63
    %87 = vmatpush.msra.mxu0 %v62
    %88 = vmatpush.msra.mxu0 %v61
    %89 = vmatpush.msra.mxu0 %v60
    %90 = vmatpush.msra.mxu0 %v59
    %91 = vmatmul.f32.gmra.mxu0 %v58
    %v92 = vpop.f32.mrf.mxu0
    %v93 = vadd.f32 0.0, %v92
    %94 = vdwg.mxu0
    %v95 = vmul.f32 %v58, %v58
    %96 = vmatpush.msra.mxu0 %v74
    %97 = vmatpush.msra.mxu0 %v73
    %98 = vmatpush.msra.mxu0 %v72
    %99 = vmatpush.msra.mxu0 %v71
    %100 = vmatpush.msra.mxu0 %v70
    %101 = vmatpush.msra.mxu0 %v69
    %102 = vmatpush.msra.mxu0 %v68
    %103 = vmatpush.msra.mxu0 %v67
    %104 = vmatpush.msra.mxu0 %v66
    %105 = vmatpush.msra.mxu0 %v65
    %106 = vmatpush.msra.mxu0 %v64
    %107 = vmatpush.msra.mxu0 %v63
    %108 = vmatpush.msra.mxu0 %v62
    %109 = vmatpush.msra.mxu0 %v61
    %110 = vmatpush.msra.mxu0 %v60
    %111 = vmatpush.msra.mxu0 %v59
    %112 = vmatmul.f32.gmra.mxu0 %v95
    %v113 = vpop.f32.mrf.mxu0
    %v114 = vadd.f32 0.0, %v113
    %115 = vdwg.mxu0
    %v116 = vmul.f32 %v93, 0.03125
    %v117 = vmul.f32 %v114, 0.03125
    %v118 = vmul.f32 %v116, %v116
    %v119 = vsub.f32 %v117, %v118
    %v120 = vmax.f32 %v119, 0.0
    %v121 = vadd.f32 %v120, 1e-05
    %v122 = vrsqrt.pop %v121
    %v123 = vmul.f32 %v122, %v121
    %v124 = vmul.f32 %v123, %v122
    %v125 = vmul.f32 0.5, %v124
    %v126 = vsub.f32 1.5, %v125
    %v127 = vmul.f32 %v122, %v126
    %vm128 = vweird.f32 %v121
    %vm129 = vweird.f32 %v122
    %vm130 = vmor %vm128, %vm129
    %v131 = vsel %vm130, %v122, %v127
    %v132 = vmul.f32 %v58, %v131
    %v133 = vld [vmem:[#allocation5] sm:$0x1]
    %v135 = vperm.slane %v133, 0
    %v137 = vmul.f32 %v132, %v135
    %138 = vst [vmem:[#allocation8] sm:$0xff] %v137
    // Predicated region
    $region26: #{tpu_custom_call.1} parent=1 // pred_check
      _
    $region27: #{tpu_custom_call.1} parent=1 // pred_check_branch
      %140 = sbr.rel (0) target = $region29
    $region28: #{tpu_custom_call.1} parent=1 // pred_region
      %142 = vsyncadd [#allocation4], 0
      %s144 = sshll.u32 [#allocation8], 4
      %s145 = int_to_ptr.vmem [resolvable:$true] %s144
      %s146 = sshll.u32 %s3, 4
      %s147 = int_to_ptr.hbm [resolvable:$true] %s146
      %149 = dma.vmem_to_hbm [thread:$0]  %s145, 128, %s147, [#allocation4]
    $region29: #{tpu_custom_call.1} parent=1 // pred_fallthru
      _
    // Predicated region
    $region30: #{tpu_custom_call.1} parent=1 // pred_check
      _
    $region31: #{tpu_custom_call.1} parent=1 // pred_check_branch
      %151 = sbr.rel (0) target = $region33
    $region32: #{tpu_custom_call.1} parent=1 // pred_region
      %153 = dma.done [#allocation4], 128
    $region33: #{tpu_custom_call.1} parent=1 // pred_fallthru
      _
    %154 = vsyncpa [#allocation3], 1
    %155 = vsyncpa [#allocation6], 1
    %156 = vsyncpa [#allocation4], 1

</llo_original>
